<compile_context>
chip_gen: v7x
topology: tpu7x:2x2x1
jax: 0.10.0
libtpu: 0.0.40
codegen_flags: <defaults>
</compile_context>

<pallas_src>
import math
from functools import partial

import jax
import jax.numpy as jnp
from jax.experimental import pallas as pl
from jax.experimental.pallas import tpu as pltpu

_LANE = 128
_TWO_PI = 2.0 * math.pi


def _round_up(n: int, m: int) -> int:
    return ((n + m - 1) // m) * m


def _pos_emb_kernel(x_ref, w_ref, out_ref, *, half_dim):
    # x_ref:   (1, TB)              batch tile on the lane axis (lane-dense)
    # w_ref:   (half_dim, 1)        full weights column, broadcast across lanes
    # out_ref: (2*half_dim+1, TB)   rows [0:h)=sin, [h:2h)=cos, row 2h = x
    x = x_ref[...]                          # (1, TB)
    xs = x * _TWO_PI                        # fold 2*pi onto the single x row
    freqs = w_ref[...] * xs                 # (half_dim, TB) outer product via broadcast
    out_ref[0:half_dim, :] = jnp.sin(freqs)             # sublane offset 0   (aligned)
    out_ref[half_dim:2 * half_dim, :] = jnp.cos(freqs)  # sublane offset h   (aligned for h%8==0)
    out_ref[2 * half_dim:2 * half_dim + 1, :] = x       # x pass-through row (last)


def random_or_learned_sinusoidal_pos_emb(x, weights):
    """x: (B,) float; weights: (half_dim,) float -> (B, 2*half_dim + 1) float32."""
    assert x.ndim == 1 and weights.ndim == 1
    b = x.shape[0]
    h = weights.shape[0]
    out_rows = 2 * h + 1

    x = x.astype(jnp.float32)
    weights = weights.astype(jnp.float32)

    # Pad the batch (lane axis) to 128 only — never to a multiple of the tile.
    b_pad = _round_up(b, _LANE)

    # Lane tile: as large as possible while keeping the double-buffered output tile
    # (the dominant VMEM consumer: 2 bufs * out_rows * tb * 4B) under ~6 MiB, so we
    # stay well inside v5e's 16 MiB default scoped-VMEM budget (v6e/v7x: 32 MiB).
    vmem_budget = 6 * 1024 * 1024
    tb = (vmem_budget // (2 * 4 * out_rows)) // _LANE * _LANE
    tb = max(_LANE, min(tb, 32768, b_pad))
    # v7x dual-TensorCore: guarantee >= 2 grid steps whenever there are >= 2 lane
    # tiles of work, so the "parallel" axis actually shards across both cores.
    if b_pad >= 2 * _LANE:
        tb = min(tb, _round_up(pl.cdiv(b_pad, 2), _LANE))
    grid = (pl.cdiv(b_pad, tb),)   # boundary block (if any) is masked by Pallas

    x_row = jnp.pad(x, (0, b_pad - b)).reshape(1, b_pad)   # (1, B_pad)
    w_col = weights.reshape(h, 1)                          # (h, 1)

    # sin/cos lower to VPU range-reduction + polynomial code on TPU (not EUP), so
    # count them as flops; advisory only.
    cost = pl.CostEstimate(
        flops=32 * b_pad * h,
        transcendentals=0,
        bytes_accessed=4 * (b_pad + h + out_rows * b_pad),
    )

    comb = pl.pallas_call(
        partial(_pos_emb_kernel, half_dim=h),
        out_shape=jax.ShapeDtypeStruct((out_rows, b_pad), jnp.float32),
        grid=grid,
        in_specs=[
            pl.BlockSpec((1, tb), lambda i: (0, i)),        # x tile (lane axis)
            pl.BlockSpec((h, 1), lambda i: (0, 0)),         # full weights column
        ],
        out_specs=pl.BlockSpec((out_rows, tb), lambda i: (0, i)),  # merged, lane-dense
        compiler_params=pltpu.CompilerParams(
            dimension_semantics=("parallel",),
        ),
        cost_estimate=cost,
    )(x_row, w_col)

    # Single fused wrapper pass: drop lane padding, move the x row to the front,
    # transpose back to (B, 2*half_dim+1) == torch.cat((x, sin, cos), dim=-1).
    comb = comb[:, :b]
    return jnp.concatenate([comb[2 * h:], comb[:2 * h]], axis=0).T


def reference(x, weights):
    x = x.astype(jnp.float32)
    weights = weights.astype(jnp.float32)
    freqs = x[:, None] * weights[None, :] * 2.0 * math.pi
    return jnp.concatenate([x[:, None], jnp.sin(freqs), jnp.cos(freqs)], axis=-1)


if __name__ == "__main__":
    key = jax.random.PRNGKey(0)
    k_x, k_w, k_x2 = jax.random.split(key, 3)

    dim = 32                 # module arg `dim`; must be even
    half_dim = dim // 2

    # torch.randn(half_dim) analogue.
    weights = jax.random.normal(k_w, (half_dim,), dtype=jnp.float32)

    # Continuous-time timesteps t in [0, 1) (v-diffusion convention), shape (B,).
    batch = 8
    x = jax.random.uniform(k_x, (batch,), dtype=jnp.float32)

    out = jax.block_until_ready(random_or_learned_sinusoidal_pos_emb(x, weights))
    ref = reference(x, weights)
    assert out.shape == (batch, dim + 1), out.shape
    assert jnp.allclose(out, ref, atol=5e-4, rtol=5e-4), float(jnp.max(jnp.abs(out - ref)))

    # Second shape: exercises lane padding (200 -> 256) and a 2-step parallel grid.
    batch2 = 200
    x2 = jax.random.uniform(k_x2, (batch2,), dtype=jnp.float32)
    out2 = jax.block_until_ready(random_or_learned_sinusoidal_pos_emb(x2, weights))
    ref2 = reference(x2, weights)
    assert out2.shape == (batch2, dim + 1), out2.shape
    assert jnp.allclose(out2, ref2, atol=5e-4, rtol=5e-4), float(jnp.max(jnp.abs(out2 - ref2)))

    print("KERNEL_OK")
</pallas_src>

<mosaic_0001>
module attributes {stable_mosaic.version = 11 : i64} {
  func.func @_pos_emb_kernel(%arg0: i32, %arg1: memref<1x128xf32, #tpu.memory_space<vmem>>, %arg2: memref<16x1xf32, #tpu.memory_space<vmem>>, %arg3: memref<33x128xf32, #tpu.memory_space<vmem>>) attributes {dimension_semantics = [#tpu.dimension_semantics<parallel>], iteration_bounds = array<i64: 1>, scalar_prefetch = 0 : i64, scratch_operands = 0 : i64, tpu.core_type = #tpu.core_type<tc>, window_params = [{transform_indices = @transform_0, window_bounds = array<i64: 1, 128>}, {pipeline_mode = #tpu.pipeline_mode<synchronous>, transform_indices = @transform_1, window_bounds = array<i64: 16, 1>}, {transform_indices = @transform_2, window_bounds = array<i64: 33, 128>}]} {
    %c0 = arith.constant 0 : index
    %c0_0 = arith.constant 0 : index
    %0 = vector.load %arg1[%c0, %c0_0] : memref<1x128xf32, #tpu.memory_space<vmem>>, vector<1x128xf32>
    %cst = arith.constant 6.28318548 : f32
    %1 = vector.broadcast %cst : f32 to vector<1x128xf32>
    %2 = arith.mulf %0, %1 : vector<1x128xf32>
    %c0_1 = arith.constant 0 : index
    %c0_2 = arith.constant 0 : index
    %3 = vector.load %arg2[%c0_1, %c0_2] : memref<16x1xf32, #tpu.memory_space<vmem>>, vector<16x1xf32>
    %4 = vector.broadcast %3 : vector<16x1xf32> to vector<16x128xf32>
    %5 = vector.broadcast %2 : vector<1x128xf32> to vector<16x128xf32>
    %6 = arith.mulf %4, %5 : vector<16x128xf32>
    %7 = math.sin %6 : vector<16x128xf32>
    %c0_3 = arith.constant 0 : index
    %c0_4 = arith.constant 0 : index
    %8 = vector.load %arg3[%c0_3, %c0_4] : memref<33x128xf32, #tpu.memory_space<vmem>>, vector<16x128xf32>
    tpu.vector_store %arg3[%c0_3, %c0_4], %7 {strides = array<i32>} : memref<33x128xf32, #tpu.memory_space<vmem>>, vector<16x128xf32>,
    %9 = math.cos %6 : vector<16x128xf32>
    %c16 = arith.constant 16 : index
    %c0_5 = arith.constant 0 : index
    %10 = vector.load %arg3[%c16, %c0_5] : memref<33x128xf32, #tpu.memory_space<vmem>>, vector<16x128xf32>
    tpu.vector_store %arg3[%c16, %c0_5], %9 {strides = array<i32>} : memref<33x128xf32, #tpu.memory_space<vmem>>, vector<16x128xf32>,
    %c32 = arith.constant 32 : index
    %c0_6 = arith.constant 0 : index
    %11 = vector.load %arg3[%c32, %c0_6] : memref<33x128xf32, #tpu.memory_space<vmem>>, vector<1x128xf32>
    tpu.vector_store %arg3[%c32, %c0_6], %0 {strides = array<i32>} : memref<33x128xf32, #tpu.memory_space<vmem>>, vector<1x128xf32>,
    return
  }
  func.func @transform_0(%arg0: i32) -> (i32, i32) {
    %c0_i32 = arith.constant 0 : i32
    %c0_i32_0 = arith.constant 0 : i32
    return %c0_i32, %arg0 : i32, i32
  }
  func.func @transform_1(%arg0: i32) -> (i32, i32) {
    %c0_i32 = arith.constant 0 : i32
    %c0_i32_0 = arith.constant 0 : i32
    %c0_i32_1 = arith.constant 0 : i32
    return %c0_i32, %c0_i32_0 : i32, i32
  }
  func.func @transform_2(%arg0: i32) -> (i32, i32) {
    %c0_i32 = arith.constant 0 : i32
    %c0_i32_0 = arith.constant 0 : i32
    return %c0_i32, %arg0 : i32, i32
  }
}

</mosaic_0001>

<llo_original>
// kernel: tpu_custom_call.1
$region0: #{tpu_custom_call.1}
  #allocation0 [shape = 'u32[]', space=smem, size = 0x4, offset = 0x4, fixed_abs, tag = 'smem constant byte address 0x4 - core index']
  #allocation1 [shape = 'u32[144,128]{1,0:T(1,128)}', space=vmem, size = 0x12000, scoped, tag = 'internal scratch']
  %s0 = inlined_call_operand.vmem [shape: f32[1,128], index: 0, kind: input, shape index: {}]
  %s1 = inlined_call_operand.vmem [shape: f32[16,1], index: 1, kind: input, shape index: {}]
  %s2 = inlined_call_operand.hbm [shape: f32[33,128], index: 2, kind: output, shape index: {}]
  %s3 = sld [smem:[#allocation0]]
  $region18: #{tpu_custom_call.1} parent=0
    _
  %s5 = ssub.s32 1, %s3
  %s6 = scalar_select 0, %s5, %s3
  $region1: #{tpu_custom_call.1} parent=0
    #allocation2 [shape = 'u8[20480]{0}', space=vmem, size = 0x5000, scoped, tag = 'output window, operand 0, single buffered']
    #allocation3 [shape = 's32[1]{0}', space=sflag, size = 0x4, scoped, tag = 'scoped memory for tpu_custom_call.1']
    %7 = vsyncpa [#allocation3], 0
    // Predicated region
    $region2: #{tpu_custom_call.1} parent=1 // pred_check
      _
    $region3: #{tpu_custom_call.1} parent=1 // pred_check_branch
      %9 = sbr.rel (0) target = $region5
    $region4: #{tpu_custom_call.1} parent=1 // pred_region
      _
    $region5: #{tpu_custom_call.1} parent=1 // pred_fallthru
      _
    // Predicated region
    $region6: #{tpu_custom_call.1} parent=1 // pred_check
      _
    $region7: #{tpu_custom_call.1} parent=1 // pred_check_branch
      %11 = sbr.rel (0) target = $region9
    $region8: #{tpu_custom_call.1} parent=1 // pred_region
      _
    $region9: #{tpu_custom_call.1} parent=1 // pred_fallthru
      _
    %v12 = vld [vmem:[%s0] sm:$0x1]
    %v13 = vmul.f32 %v12, 6.2831855
    %v14 = vld [vmem:[%s1] sm:$0xff]
    %v15 = vld [vmem:[%s1 + $0x8] sm:$0xff]
    %17 = vset.pattern.permute.xlu0 0
    %18 = vperm.xlu0 %17, %v14
    %v19 = vpop.permute.xlu0 %18
    %22 = vset.pattern.permute.xlu0 0
    %23 = vperm.xlu0 %22, %v15
    %v24 = vpop.permute.xlu0 %23
    %v27 = vlaneseq
    %v28 = vshrl.u32 %v27, 7
    %v29 = vsub.s32 0, %v28
    %v30 = vrot.slane %v13, %v29
    %v32 = vmul.f32 %v19, %v30
    %v33 = vmul.f32 %v24, %v30
    %v34 = vand.u32 2147483647, %v32
    %vm35 = vcmp.le.f32.partialorder %v34, 0.7853982
    %vm36 = vcmp.lt.s32.totalorder %v32, 0
    %v37 = vand.u32 %v32, 2139095040
    %v38 = vshrl.u32 %v37, 23
    %v39 = vsub.s32 %v38, 127
    %v40 = vand.u32 2147483647, %v32
    %v41 = vand.u32 %v40, 8388607
    %v42 = vor.u32 %v41, 8388608
    %v43 = vsub.s32 0, %v42
    %v44 = vadd.s32 %v39, 1
    %vm45 = vcmp.gt.s32.totalorder %v44, 0
    %v46 = vsel %vm45, %v44, 0
    %v47 = vshrl.u32 %v46, 5
    %v48 = vand.u32 %v46, 31
    %v49 = vsub.s32 32, %v48
    %v50 = vshrl.u32 683565275, %v49
    %v51 = vshll.u32 683565275, %v48
    %v52 = vshrl.u32 2475754826, %v49
    %v53 = vor.u32 %v51, %v52
    %v54 = vshll.u32 2475754826, %v48
    %v55 = vshrl.u32 2131351028, %v49
    %v56 = vor.u32 %v54, %v55
    %v57 = vshll.u32 2131351028, %v48
    %v58 = vshrl.u32 2102212464, %v49
    %v59 = vor.u32 %v57, %v58
    %v60 = vshll.u32 2102212464, %v48
    %v61 = vshrl.u32 920167782, %v49
    %v62 = vor.u32 %v60, %v61
    %v63 = vshll.u32 920167782, %v48
    %v64 = vshrl.u32 1326507024, %v49
    %v65 = vor.u32 %v63, %v64
    %vm66 = vcmp.lt.s32.totalorder %v47, 1
    %vm67 = vcmp.lt.s32.totalorder %v47, 2
    %vm68 = vcmp.lt.s32.totalorder %v47, 3
    %vm69 = vcmp.lt.s32.totalorder %v47, 4
    %v70 = vsel %vm66, %v50, %v53
    %v71 = vsel %vm69, %v59, 2102212464
    %v72 = vsel %vm68, %v56, %v71
    %v73 = vsel %vm67, %v70, %v72
    %v74 = vsel %vm66, %v53, %v56
    %v75 = vsel %vm69, %v62, 920167782
    %v76 = vsel %vm68, %v59, %v75
    %v77 = vsel %vm67, %v74, %v76
    %v78 = vsel %vm66, %v56, %v59
    %v79 = vsel %vm69, %v65, 1326507024
    %v80 = vsel %vm68, %v62, %v79
    %v81 = vsel %vm67, %v78, %v80
    %v82 = vshll.u32 %v42, 8
    %v83 = vmul.u32.u64.compose %v82, %v81
    %v84 = vextract.low.u32 %v83
    %v85 = vextract.high.u32 %v83
    %v86 = vmul.u32.u64.compose %v82, %v77
    %v87 = vextract.low.u32 %v86
    %v88 = vextract.high.u32 %v86
    %v89 = vmul.u32 %v82, %v73
    %v90 = vadd.s32 %v85, %v87
    %vm91 = vc.u32 %v85, %v87
    %v92 = vadd.s32 %v88, 1
    %v93 = vsel %vm91, %v92, %v88
    %v94 = vadd.s32 %v89, %v93
    %v95 = vadd.s32 %v94, 536870912
    %v96 = vshrl.u32 %v95, 30
    %v97 = vshll.u32 %v96, 30
    %v98 = vsub.s32 %v94, %v97
    %vm99 = vcmp.lt.s32.totalorder %v98, 0
    %v100 = vsub.s32 0, %v98
    %v101 = vsel %vm99, %v100, %v98
    %v102 = vclz %v101
    %v103 = vsub.s32 %v102, 2
    %vm104 = vcmp.gt.s32.totalorder 0, %v103
    %v105 = vsel %vm104, 0, %v103
    %v106 = vsub.s32 32, %v105
    %v107 = vshll.u32 %v98, %v105
    %v108 = vshrl.u32 %v90, %v106
    %v109 = vor.u32 %v107, %v108
    %v110 = vsub.s32 4294967266, %v105
    %v111 = vadd.s32 %v110, 127
    %v112 = vshll.u32 %v111, 23
    %v113 = vor.u32 4788187, %v112
    %v114 = vand.u32 2147483647, %v113
    %v116 = vcvt.s32.f32 %v109
    %v117 = vmul.f32 %v116, %v114
    %v118 = vxor.u32 %v117, 2147483648
    %v119 = vsel %vm36, %v118, %v117
    %v120 = vsub.s32 4, %v96
    %v121 = vsel %vm36, %v120, %v96
    %v122 = vsel %vm35, %v32, %v119
    %v123 = vsel %vm35, 0, %v121
    %v124 = vcosq.f32.pop %v122
    %v125 = vsinq.f32.pop %v122
    %vm126 = vweird.f32 %v32
    %v127 = vadd.s32 %v123, 3
    %v128 = vand.u32 %v127, 3
    %vm129 = vcmp.lt.s32.totalorder %v128, 2
    %vm130 = vcmp.eq.s32.totalorder %v128, 0
    %v131 = vxor.u32 %v125, 2147483648
    %v132 = vsel %vm130, %v124, %v131
    %vm133 = vcmp.eq.s32.totalorder %v128, 2
    %v134 = vxor.u32 %v124, 2147483648
    %v135 = vsel %vm133, %v134, %v125
    %v136 = vsel %vm129, %v132, %v135
    %v137 = vsel %vm126, nan, %v136
    %v138 = vand.u32 2147483647, %v33
    %vm139 = vcmp.le.f32.partialorder %v138, 0.7853982
    %vm140 = vcmp.lt.s32.totalorder %v33, 0
    %v141 = vand.u32 %v33, 2139095040
    %v142 = vshrl.u32 %v141, 23
    %v143 = vsub.s32 %v142, 127
    %v144 = vand.u32 2147483647, %v33
    %v145 = vand.u32 %v144, 8388607
    %v146 = vor.u32 %v145, 8388608
    %v147 = vsub.s32 0, %v146
    %v148 = vadd.s32 %v143, 1
    %vm149 = vcmp.gt.s32.totalorder %v148, 0
    %v150 = vsel %vm149, %v148, 0
    %v151 = vshrl.u32 %v150, 5
    %v152 = vand.u32 %v150, 31
    %v153 = vsub.s32 32, %v152
    %v154 = vshrl.u32 683565275, %v153
    %v155 = vshll.u32 683565275, %v152
    %v156 = vshrl.u32 2475754826, %v153
    %v157 = vor.u32 %v155, %v156
    %v158 = vshll.u32 2475754826, %v152
    %v159 = vshrl.u32 2131351028, %v153
    %v160 = vor.u32 %v158, %v159
    %v161 = vshll.u32 2131351028, %v152
    %v162 = vshrl.u32 2102212464, %v153
    %v163 = vor.u32 %v161, %v162
    %v164 = vshll.u32 2102212464, %v152
    %v165 = vshrl.u32 920167782, %v153
    %v166 = vor.u32 %v164, %v165
    %v167 = vshll.u32 920167782, %v152
    %v168 = vshrl.u32 1326507024, %v153
    %v169 = vor.u32 %v167, %v168
    %vm170 = vcmp.lt.s32.totalorder %v151, 1
    %vm171 = vcmp.lt.s32.totalorder %v151, 2
    %vm172 = vcmp.lt.s32.totalorder %v151, 3
    %vm173 = vcmp.lt.s32.totalorder %v151, 4
    %v174 = vsel %vm170, %v154, %v157
    %v175 = vsel %vm173, %v163, 2102212464
    %v176 = vsel %vm172, %v160, %v175
    %v177 = vsel %vm171, %v174, %v176
    %v178 = vsel %vm170, %v157, %v160
    %v179 = vsel %vm173, %v166, 920167782
    %v180 = vsel %vm172, %v163, %v179
    %v181 = vsel %vm171, %v178, %v180
    %v182 = vsel %vm170, %v160, %v163
    %v183 = vsel %vm173, %v169, 1326507024
    %v184 = vsel %vm172, %v166, %v183
    %v185 = vsel %vm171, %v182, %v184
    %v186 = vshll.u32 %v146, 8
    %v187 = vmul.u32.u64.compose %v186, %v185
    %v188 = vextract.low.u32 %v187
    %v189 = vextract.high.u32 %v187
    %v190 = vmul.u32.u64.compose %v186, %v181
    %v191 = vextract.low.u32 %v190
    %v192 = vextract.high.u32 %v190
    %v193 = vmul.u32 %v186, %v177
    %v194 = vadd.s32 %v189, %v191
    %vm195 = vc.u32 %v189, %v191
    %v196 = vadd.s32 %v192, 1
    %v197 = vsel %vm195, %v196, %v192
    %v198 = vadd.s32 %v193, %v197
    %v199 = vadd.s32 %v198, 536870912
    %v200 = vshrl.u32 %v199, 30
    %v201 = vshll.u32 %v200, 30
    %v202 = vsub.s32 %v198, %v201
    %vm203 = vcmp.lt.s32.totalorder %v202, 0
    %v204 = vsub.s32 0, %v202
    %v205 = vsel %vm203, %v204, %v202
    %v206 = vclz %v205
    %v207 = vsub.s32 %v206, 2
    %vm208 = vcmp.gt.s32.totalorder 0, %v207
    %v209 = vsel %vm208, 0, %v207
    %v210 = vsub.s32 32, %v209
    %v211 = vshll.u32 %v202, %v209
    %v212 = vshrl.u32 %v194, %v210
    %v213 = vor.u32 %v211, %v212
    %v214 = vsub.s32 4294967266, %v209
    %v215 = vadd.s32 %v214, 127
    %v216 = vshll.u32 %v215, 23
    %v217 = vor.u32 4788187, %v216
    %v218 = vand.u32 2147483647, %v217
    %v220 = vcvt.s32.f32 %v213
    %v221 = vmul.f32 %v220, %v218
    %v222 = vxor.u32 %v221, 2147483648
    %v223 = vsel %vm140, %v222, %v221
    %v224 = vsub.s32 4, %v200
    %v225 = vsel %vm140, %v224, %v200
    %v226 = vsel %vm139, %v33, %v223
    %v227 = vsel %vm139, 0, %v225
    %v228 = vcosq.f32.pop %v226
    %v229 = vsinq.f32.pop %v226
    %vm230 = vweird.f32 %v33
    %v231 = vadd.s32 %v227, 3
    %v232 = vand.u32 %v231, 3
    %vm233 = vcmp.lt.s32.totalorder %v232, 2
    %vm234 = vcmp.eq.s32.totalorder %v232, 0
    %v235 = vxor.u32 %v229, 2147483648
    %v236 = vsel %vm234, %v228, %v235
    %vm237 = vcmp.eq.s32.totalorder %v232, 2
    %v238 = vxor.u32 %v228, 2147483648
    %v239 = vsel %vm237, %v238, %v229
    %v240 = vsel %vm233, %v236, %v239
    %v241 = vsel %vm230, nan, %v240
    %242 = vst [vmem:[#allocation2] sm:$0xff] %v137
    %243 = vst [vmem:[#allocation2 + $0x8] sm:$0xff] %v241
    %v244 = vand.u32 2147483647, %v32
    %vm245 = vcmp.le.f32.partialorder %v244, 0.7853982
    %vm246 = vcmp.lt.s32.totalorder %v32, 0
    %v247 = vand.u32 %v32, 2139095040
    %v248 = vshrl.u32 %v247, 23
    %v249 = vsub.s32 %v248, 127
    %v250 = vand.u32 2147483647, %v32
    %v251 = vand.u32 %v250, 8388607
    %v252 = vor.u32 %v251, 8388608
    %v253 = vsub.s32 0, %v252
    %v254 = vadd.s32 %v249, 1
    %vm255 = vcmp.gt.s32.totalorder %v254, 0
    %v256 = vsel %vm255, %v254, 0
    %v257 = vshrl.u32 %v256, 5
    %v258 = vand.u32 %v256, 31
    %v259 = vsub.s32 32, %v258
    %v260 = vshrl.u32 683565275, %v259
    %v261 = vshll.u32 683565275, %v258
    %v262 = vshrl.u32 2475754826, %v259
    %v263 = vor.u32 %v261, %v262
    %v264 = vshll.u32 2475754826, %v258
    %v265 = vshrl.u32 2131351028, %v259
    %v266 = vor.u32 %v264, %v265
    %v267 = vshll.u32 2131351028, %v258
    %v268 = vshrl.u32 2102212464, %v259
    %v269 = vor.u32 %v267, %v268
    %v270 = vshll.u32 2102212464, %v258
    %v271 = vshrl.u32 920167782, %v259
    %v272 = vor.u32 %v270, %v271
    %v273 = vshll.u32 920167782, %v258
    %v274 = vshrl.u32 1326507024, %v259
    %v275 = vor.u32 %v273, %v274
    %vm276 = vcmp.lt.s32.totalorder %v257, 1
    %vm277 = vcmp.lt.s32.totalorder %v257, 2
    %vm278 = vcmp.lt.s32.totalorder %v257, 3
    %vm279 = vcmp.lt.s32.totalorder %v257, 4
    %v280 = vsel %vm276, %v260, %v263
    %v281 = vsel %vm279, %v269, 2102212464
    %v282 = vsel %vm278, %v266, %v281
    %v283 = vsel %vm277, %v280, %v282
    %v284 = vsel %vm276, %v263, %v266
    %v285 = vsel %vm279, %v272, 920167782
    %v286 = vsel %vm278, %v269, %v285
    %v287 = vsel %vm277, %v284, %v286
    %v288 = vsel %vm276, %v266, %v269
    %v289 = vsel %vm279, %v275, 1326507024
    %v290 = vsel %vm278, %v272, %v289
    %v291 = vsel %vm277, %v288, %v290
    %v292 = vshll.u32 %v252, 8
    %v293 = vmul.u32.u64.compose %v292, %v291
    %v294 = vextract.low.u32 %v293
    %v295 = vextract.high.u32 %v293
    %v296 = vmul.u32.u64.compose %v292, %v287
    %v297 = vextract.low.u32 %v296
    %v298 = vextract.high.u32 %v296
    %v299 = vmul.u32 %v292, %v283
    %v300 = vadd.s32 %v295, %v297
    %vm301 = vc.u32 %v295, %v297
    %v302 = vadd.s32 %v298, 1
    %v303 = vsel %vm301, %v302, %v298
    %v304 = vadd.s32 %v299, %v303
    %v305 = vadd.s32 %v304, 536870912
    %v306 = vshrl.u32 %v305, 30
    %v307 = vshll.u32 %v306, 30
    %v308 = vsub.s32 %v304, %v307
    %vm309 = vcmp.lt.s32.totalorder %v308, 0
    %v310 = vsub.s32 0, %v308
    %v311 = vsel %vm309, %v310, %v308
    %v312 = vclz %v311
    %v313 = vsub.s32 %v312, 2
    %vm314 = vcmp.gt.s32.totalorder 0, %v313
    %v315 = vsel %vm314, 0, %v313
    %v316 = vsub.s32 32, %v315
    %v317 = vshll.u32 %v308, %v315
    %v318 = vshrl.u32 %v300, %v316
    %v319 = vor.u32 %v317, %v318
    %v320 = vsub.s32 4294967266, %v315
    %v321 = vadd.s32 %v320, 127
    %v322 = vshll.u32 %v321, 23
    %v323 = vor.u32 4788187, %v322
    %v324 = vand.u32 2147483647, %v323
    %v326 = vcvt.s32.f32 %v319
    %v327 = vmul.f32 %v326, %v324
    %v328 = vxor.u32 %v327, 2147483648
    %v329 = vsel %vm246, %v328, %v327
    %v330 = vsub.s32 4, %v306
    %v331 = vsel %vm246, %v330, %v306
    %v332 = vsel %vm245, %v32, %v329
    %v333 = vsel %vm245, 0, %v331
    %v334 = vcosq.f32.pop %v332
    %v335 = vsinq.f32.pop %v332
    %vm336 = vweird.f32 %v32
    %v337 = vand.u32 %v333, 3
    %vm338 = vcmp.lt.s32.totalorder %v337, 2
    %vm339 = vcmp.eq.s32.totalorder %v337, 0
    %v340 = vxor.u32 %v335, 2147483648
    %v341 = vsel %vm339, %v334, %v340
    %vm342 = vcmp.eq.s32.totalorder %v337, 2
    %v343 = vxor.u32 %v334, 2147483648
    %v344 = vsel %vm342, %v343, %v335
    %v345 = vsel %vm338, %v341, %v344
    %v346 = vsel %vm336, nan, %v345
    %v347 = vand.u32 2147483647, %v33
    %vm348 = vcmp.le.f32.partialorder %v347, 0.7853982
    %vm349 = vcmp.lt.s32.totalorder %v33, 0
    %v350 = vand.u32 %v33, 2139095040
    %v351 = vshrl.u32 %v350, 23
    %v352 = vsub.s32 %v351, 127
    %v353 = vand.u32 2147483647, %v33
    %v354 = vand.u32 %v353, 8388607
    %v355 = vor.u32 %v354, 8388608
    %v356 = vsub.s32 0, %v355
    %v357 = vadd.s32 %v352, 1
    %vm358 = vcmp.gt.s32.totalorder %v357, 0
    %v359 = vsel %vm358, %v357, 0
    %v360 = vshrl.u32 %v359, 5
    %v361 = vand.u32 %v359, 31
    %v362 = vsub.s32 32, %v361
    %v363 = vshrl.u32 683565275, %v362
    %v364 = vshll.u32 683565275, %v361
    %v365 = vshrl.u32 2475754826, %v362
    %v366 = vor.u32 %v364, %v365
    %v367 = vshll.u32 2475754826, %v361
    %v368 = vshrl.u32 2131351028, %v362
    %v369 = vor.u32 %v367, %v368
    %v370 = vshll.u32 2131351028, %v361
    %v371 = vshrl.u32 2102212464, %v362
    %v372 = vor.u32 %v370, %v371
    %v373 = vshll.u32 2102212464, %v361
    %v374 = vshrl.u32 920167782, %v362
    %v375 = vor.u32 %v373, %v374
    %v376 = vshll.u32 920167782, %v361
    %v377 = vshrl.u32 1326507024, %v362
    %v378 = vor.u32 %v376, %v377
    %vm379 = vcmp.lt.s32.totalorder %v360, 1
    %vm380 = vcmp.lt.s32.totalorder %v360, 2
    %vm381 = vcmp.lt.s32.totalorder %v360, 3
    %vm382 = vcmp.lt.s32.totalorder %v360, 4
    %v383 = vsel %vm379, %v363, %v366
    %v384 = vsel %vm382, %v372, 2102212464
    %v385 = vsel %vm381, %v369, %v384
    %v386 = vsel %vm380, %v383, %v385
    %v387 = vsel %vm379, %v366, %v369
    %v388 = vsel %vm382, %v375, 920167782
    %v389 = vsel %vm381, %v372, %v388
    %v390 = vsel %vm380, %v387, %v389
    %v391 = vsel %vm379, %v369, %v372
    %v392 = vsel %vm382, %v378, 1326507024
    %v393 = vsel %vm381, %v375, %v392
    %v394 = vsel %vm380, %v391, %v393
    %v395 = vshll.u32 %v355, 8
    %v396 = vmul.u32.u64.compose %v395, %v394
    %v397 = vextract.low.u32 %v396
    %v398 = vextract.high.u32 %v396
    %v399 = vmul.u32.u64.compose %v395, %v390
    %v400 = vextract.low.u32 %v399
    %v401 = vextract.high.u32 %v399
    %v402 = vmul.u32 %v395, %v386
    %v403 = vadd.s32 %v398, %v400
    %vm404 = vc.u32 %v398, %v400
    %v405 = vadd.s32 %v401, 1
    %v406 = vsel %vm404, %v405, %v401
    %v407 = vadd.s32 %v402, %v406
    %v408 = vadd.s32 %v407, 536870912
    %v409 = vshrl.u32 %v408, 30
    %v410 = vshll.u32 %v409, 30
    %v411 = vsub.s32 %v407, %v410
    %vm412 = vcmp.lt.s32.totalorder %v411, 0
    %v413 = vsub.s32 0, %v411
    %v414 = vsel %vm412, %v413, %v411
    %v415 = vclz %v414
    %v416 = vsub.s32 %v415, 2
    %vm417 = vcmp.gt.s32.totalorder 0, %v416
    %v418 = vsel %vm417, 0, %v416
    %v419 = vsub.s32 32, %v418
    %v420 = vshll.u32 %v411, %v418
    %v421 = vshrl.u32 %v403, %v419
    %v422 = vor.u32 %v420, %v421
    %v423 = vsub.s32 4294967266, %v418
    %v424 = vadd.s32 %v423, 127
    %v425 = vshll.u32 %v424, 23
    %v426 = vor.u32 4788187, %v425
    %v427 = vand.u32 2147483647, %v426
    %v429 = vcvt.s32.f32 %v422
    %v430 = vmul.f32 %v429, %v427
    %v431 = vxor.u32 %v430, 2147483648
    %v432 = vsel %vm349, %v431, %v430
    %v433 = vsub.s32 4, %v409
    %v434 = vsel %vm349, %v433, %v409
    %v435 = vsel %vm348, %v33, %v432
    %v436 = vsel %vm348, 0, %v434
    %v437 = vcosq.f32.pop %v435
    %v438 = vsinq.f32.pop %v435
    %vm439 = vweird.f32 %v33
    %v440 = vand.u32 %v436, 3
    %vm441 = vcmp.lt.s32.totalorder %v440, 2
    %vm442 = vcmp.eq.s32.totalorder %v440, 0
    %v443 = vxor.u32 %v438, 2147483648
    %v444 = vsel %vm442, %v437, %v443
    %vm445 = vcmp.eq.s32.totalorder %v440, 2
    %v446 = vxor.u32 %v437, 2147483648
    %v447 = vsel %vm445, %v446, %v438
    %v448 = vsel %vm441, %v444, %v447
    %v449 = vsel %vm439, nan, %v448
    %450 = vst [vmem:[#allocation2 + $0x10] sm:$0xff] %v346
    %451 = vst [vmem:[#allocation2 + $0x18] sm:$0xff] %v449
    %452 = vst [vmem:[#allocation2 + $0x20] sm:$0x1] %v12
    // Predicated region
    $region10: #{tpu_custom_call.1} parent=1 // pred_check
      _
    $region11: #{tpu_custom_call.1} parent=1 // pred_check_branch
      %454 = sbr.rel (0) target = $region13
    $region12: #{tpu_custom_call.1} parent=1 // pred_region
      %s456 = ssub.s32 640, 640
      %457 = vsyncadd [#allocation3], %s456
      %s458 = sshll.u32 [#allocation2], 4
      %s459 = int_to_ptr.vmem [resolvable:$true] %s458
      %464 = dma.vmem_to_hbm [thread:$0]  %s459, 640, %s2, [#allocation3], 128, 128, 8
    $region13: #{tpu_custom_call.1} parent=1 // pred_fallthru
      _
    // Predicated region
    $region14: #{tpu_custom_call.1} parent=1 // pred_check
      _
    $region15: #{tpu_custom_call.1} parent=1 // pred_check_branch
      %466 = sbr.rel (0) target = $region17
    $region16: #{tpu_custom_call.1} parent=1 // pred_region
      %467 = dma.done [#allocation3], 640
    $region17: #{tpu_custom_call.1} parent=1 // pred_fallthru
      _
    %468 = vsyncpa [#allocation3], 1

</llo_original>
